<compile_context>
chip_gen: v5e
topology: v5e:2x2
jax: 0.10.0
libtpu: 0.0.40
codegen_flags: <defaults>
</compile_context>

<pallas_src>
import functools
import math

import jax
import jax.numpy as jnp
from jax import lax
from jax.experimental import pallas as pl
from jax.experimental.pallas import tpu as pltpu


def _layernorm(x):
    """torch-style layernorm over axis=1 (mean-subtract, unbiased std, no eps)."""
    n = x.shape[1]
    inv_n = 1.0 / n
    inv_nm1 = 1.0 / (n - 1)
    mean = jnp.sum(x, axis=1, keepdims=True) * inv_n
    xc = x - mean
    var = jnp.sum(xc * xc, axis=1, keepdims=True) * inv_nm1
    return xc * lax.rsqrt(var)                       # EUP rsqrt, no divide


def _softmax_rows(x):
    """Numerically-stable softmax over axis=1 (torch.softmax dim=1)."""
    m = jnp.max(x, axis=1, keepdims=True)
    e = jnp.exp(x - m)
    denom = jnp.sum(e, axis=1, keepdims=True)
    # approx=True -> EUP vrcp (idle slot), off the VALU critical path.
    return e * pl.reciprocal(denom, approx=True)


def transformer_kernel(*refs, depth, d, temp, has_us):
    if has_us:
        seq_ref, emb_ref, us_ref, w1_ref, w2_ref, ro_ref, out_ref = refs
    else:
        seq_ref, emb_ref, w1_ref, w2_ref, ro_ref, out_ref = refs
        us_ref = None

    inv_gram = 1.0 / (d * temp)                      # fused gram/d/temp scale

    seq = seq_ref[...]                               # (S, d_in), unpadded
    emb = emb_ref[...]                               # (d_in, d), 1/sqrt(d_in) pre-folded

    # embedding (scale already folded into emb at init time)
    inseq = jnp.dot(seq, emb, preferred_element_type=jnp.float32)

    # depth=2, d=32: all weights are resident in VMEM; trace-time unrolled loop.
    for l in range(depth):
        if l > 0:
            inseq = jnp.dot(inseq, us_ref[l - 1],    # static slice of (depth-1,d,d)
                            preferred_element_type=jnp.float32)

        # self-attention: gram without an explicit transpose (contract both
        # operands on the feature axis -> MXU transposed-RHS form)
        gram = lax.dot_general(inseq, inseq, (((1,), (1,)), ((), ())),
                               preferred_element_type=jnp.float32) * inv_gram
        weights = _softmax_rows(gram)
        attn = jnp.dot(weights, inseq, preferred_element_type=jnp.float32)
        post_attn = _layernorm(inseq + attn)

        # MLP (1/sqrt(d) pre-folded into W1/W2 at init time)
        g = jnp.dot(post_attn, w1_ref[l], preferred_element_type=jnp.float32)
        h = jnp.dot(jnp.maximum(g, 0.0), w2_ref[l],
                    preferred_element_type=jnp.float32)
        inseq = _layernorm(h + post_attn)

    # readout + mean, folded: mean(inseq @ ro) == (column-mean of inseq) . ro
    ro = ro_ref[...]                                          # (1, d), 1/sqrt(d) folded
    inv_s = 1.0 / inseq.shape[0]
    col_mean = jnp.sum(inseq, axis=0, keepdims=True) * inv_s  # (1, d)
    out_ref[0, 0] = jnp.sum(col_mean * ro)                    # scalar -> SMEM


def prepare_params(embedding, us, w1s, w2s, readout):
    """One-time (init-side) parameter prep: fold the constant matmul scales
    into the weights.  No per-call padding / reshaping remains."""
    d_in, d = embedding.shape
    inv_sqrt_din = 1.0 / math.sqrt(d_in)
    inv_sqrt_d = 1.0 / math.sqrt(d)
    return {
        "emb": embedding * inv_sqrt_din,                       # (d_in, d)
        "us": (us * inv_sqrt_d) if us.shape[0] > 0 else None,  # (depth-1, d, d)
        "w1": w1s * inv_sqrt_d,                                # (depth, d, d)
        "w2": w2s * inv_sqrt_d,                                # (depth, d, d)
        "ro": (readout * inv_sqrt_d).reshape(1, d),            # (1, d)
    }


def transformer_forward(seq, params, *, depth, temp=1.0):
    """seq: (S, d_in) float32; params: output of prepare_params. Returns scalar."""
    d = params["emb"].shape[1]
    has_us = params["us"] is not None

    kernel = functools.partial(transformer_kernel, depth=depth, d=d,
                               temp=float(temp), has_us=has_us)

    args = [seq, params["emb"]]
    if has_us:
        args.append(params["us"])
    args += [params["w1"], params["w2"], params["ro"]]

    out = pl.pallas_call(
        kernel,
        out_shape=jax.ShapeDtypeStruct((1, 1), jnp.float32),
        in_specs=[pl.BlockSpec(memory_space=pltpu.MemorySpace.VMEM)] * len(args),
        out_specs=pl.BlockSpec(memory_space=pltpu.MemorySpace.SMEM),
    )(*args)
    return out[0, 0]


def reference_forward(seq, embedding, us, w1s, w2s, readout, *, depth, temp=1.0):
    """Pure-JAX reference mirroring the PyTorch forward exactly."""
    d_in = seq.shape[1]
    d = embedding.shape[1]

    def layernorm(x):
        n = x.shape[1]
        m = jnp.mean(x, axis=1, keepdims=True)
        xc = x - m
        std = jnp.sqrt(jnp.sum(xc * xc, axis=1, keepdims=True) / (n - 1))
        return xc / std

    inseq = seq @ embedding / d_in ** 0.5
    for l in range(depth):
        if l > 0:
            inseq = inseq @ us[l - 1] / d ** 0.5
        gram = inseq @ inseq.T / inseq.shape[1]
        weights = jax.nn.softmax(gram / temp, axis=1)
        post_attn = layernorm(inseq + weights @ inseq)
        g = post_attn @ w1s[l] / d ** 0.5
        h = jnp.maximum(g, 0.0) @ w2s[l] / d ** 0.5
        inseq = layernorm(h + post_attn)
    return jnp.mean(inseq @ readout / d ** 0.5)


# TODO(synk): the PyTorch module also records intermediate activations
# (self.xs/ks/zs/gs/hs/As, retain_grad) for later analysis; that stateful
# bookkeeping has no Pallas equivalent and only the functional forward output
# is implemented here.

if __name__ == "__main__":
    # Small shapes consistent with the module's forward.
    S, d_in, d, depth = 8, 16, 32, 2
    vu = vw = vv = 1.0
    temp = 1.0

    key = jax.random.PRNGKey(0)
    k_seq, k_emb, k_us, k_w1, k_w2, k_ro = jax.random.split(key, 6)

    seq = jax.random.normal(k_seq, (S, d_in), dtype=jnp.float32)
    embedding = jax.random.normal(k_emb, (d_in, d), dtype=jnp.float32) * math.sqrt(vu)
    us = jax.random.normal(k_us, (depth - 1, d, d), dtype=jnp.float32) * math.sqrt(vu)
    w1s = jax.random.normal(k_w1, (depth, d, d), dtype=jnp.float32) * math.sqrt(vw)
    w2s = jax.random.normal(k_w2, (depth, d, d), dtype=jnp.float32) * math.sqrt(vw)
    readout = jax.random.normal(k_ro, (d,), dtype=jnp.float32) * math.sqrt(vv)

    # One-time init-side prep (scale folding); per-call path is pallas_call only.
    params = prepare_params(embedding, us, w1s, w2s, readout)

    out = transformer_forward(seq, params, depth=depth, temp=temp)
    out = jax.block_until_ready(out)

    ref = reference_forward(seq, embedding, us, w1s, w2s, readout,
                            depth=depth, temp=temp)
    # Tolerance loosened from 1e-4 only to cover the EUP approximate-reciprocal
    # softmax denominator (perf feedback); real implementation errors are O(1).
    assert jnp.allclose(out, ref, atol=5e-3, rtol=5e-3), (out, ref)

    print("KERNEL_OK")
</pallas_src>

<mosaic_0001>
module attributes {stable_mosaic.version = 11 : i64} {
  func.func @transformer_kernel(%arg0: memref<8x16xf32, #tpu.memory_space<vmem>>, %arg1: memref<16x32xf32, #tpu.memory_space<vmem>>, %arg2: memref<1x32x32xf32, #tpu.memory_space<vmem>>, %arg3: memref<2x32x32xf32, #tpu.memory_space<vmem>>, %arg4: memref<2x32x32xf32, #tpu.memory_space<vmem>>, %arg5: memref<1x32xf32, #tpu.memory_space<vmem>>, %arg6: memref<1x1xf32, #tpu.memory_space<smem>>) attributes {dimension_semantics = [], scalar_prefetch = 0 : i64, scratch_operands = 0 : i64, tpu.core_type = #tpu.core_type<tc>} {
    %c0 = arith.constant 0 : index
    %c0_0 = arith.constant 0 : index
    %0 = vector.load %arg0[%c0, %c0_0] : memref<8x16xf32, #tpu.memory_space<vmem>>, vector<8x16xf32>
    %c0_1 = arith.constant 0 : index
    %c0_2 = arith.constant 0 : index
    %1 = vector.load %arg1[%c0_1, %c0_2] : memref<16x32xf32, #tpu.memory_space<vmem>>, vector<16x32xf32>
    %cst = arith.constant dense<0.000000e+00> : vector<8x32xf32>
    %2 = tpu.matmul %0, %1, %cst {dimension_numbers = #tpu.dot_dimension_numbers<[1], [0], [0], [1], [0, 0, 1, 1], [], []>} : vector<8x16xf32>, vector<16x32xf32>, vector<8x32xf32> -> vector<8x32xf32>
    %cst_3 = arith.constant dense<0.000000e+00> : vector<8x8xf32>
    %3 = tpu.matmul %2, %2, %cst_3 {dimension_numbers = #tpu.dot_dimension_numbers<[1], [1], [0], [0], [0, 0, 1, 0], [], []>} : vector<8x32xf32>, vector<8x32xf32>, vector<8x8xf32> -> vector<8x8xf32>
    %cst_4 = arith.constant 3.125000e-02 : f32
    %4 = vector.broadcast %cst_4 : f32 to vector<8x8xf32>
    %5 = arith.mulf %3, %4 : vector<8x8xf32>
    %cst_5 = arith.constant dense<0xFF800000> : vector<8xf32>
    %6 = vector.multi_reduction <maximumf>, %5, %cst_5 [1] : vector<8x8xf32> to vector<8xf32>
    %7 = vector.shape_cast %6 : vector<8xf32> to vector<8x1xf32>
    %8 = vector.broadcast %7 : vector<8x1xf32> to vector<8x8xf32>
    %9 = arith.subf %5, %8 : vector<8x8xf32>
    %10 = math.exp %9 : vector<8x8xf32>
    %cst_6 = arith.constant dense<0.000000e+00> : vector<8xf32>
    %11 = vector.multi_reduction <add>, %10, %cst_6 [1] : vector<8x8xf32> to vector<8xf32>
    %12 = vector.shape_cast %11 : vector<8xf32> to vector<8x1xf32>
    %13 = tpu.reciprocal %12 {approx = true} : vector<8x1xf32> -> vector<8x1xf32>
    %14 = vector.broadcast %13 : vector<8x1xf32> to vector<8x8xf32>
    %15 = arith.mulf %10, %14 : vector<8x8xf32>
    %cst_7 = arith.constant dense<0.000000e+00> : vector<8x32xf32>
    %16 = tpu.matmul %15, %2, %cst_7 {dimension_numbers = #tpu.dot_dimension_numbers<[1], [0], [0], [1], [0, 0, 1, 1], [], []>} : vector<8x8xf32>, vector<8x32xf32>, vector<8x32xf32> -> vector<8x32xf32>
    %17 = arith.addf %2, %16 : vector<8x32xf32>
    %cst_8 = arith.constant dense<0.000000e+00> : vector<8xf32>
    %18 = vector.multi_reduction <add>, %17, %cst_8 [1] : vector<8x32xf32> to vector<8xf32>
    %19 = vector.shape_cast %18 : vector<8xf32> to vector<8x1xf32>
    %cst_9 = arith.constant 3.125000e-02 : f32
    %20 = vector.broadcast %cst_9 : f32 to vector<8x1xf32>
    %21 = arith.mulf %19, %20 : vector<8x1xf32>
    %22 = vector.broadcast %21 : vector<8x1xf32> to vector<8x32xf32>
    %23 = arith.subf %17, %22 : vector<8x32xf32>
    %24 = arith.mulf %23, %23 : vector<8x32xf32>
    %cst_10 = arith.constant dense<0.000000e+00> : vector<8xf32>
    %25 = vector.multi_reduction <add>, %24, %cst_10 [1] : vector<8x32xf32> to vector<8xf32>
    %26 = vector.shape_cast %25 : vector<8xf32> to vector<8x1xf32>
    %cst_11 = arith.constant 0.0322580636 : f32
    %27 = vector.broadcast %cst_11 : f32 to vector<8x1xf32>
    %28 = arith.mulf %26, %27 : vector<8x1xf32>
    %29 = math.rsqrt %28 : vector<8x1xf32>
    %30 = vector.broadcast %29 : vector<8x1xf32> to vector<8x32xf32>
    %31 = arith.mulf %23, %30 : vector<8x32xf32>
    %c0_12 = arith.constant 0 : index
    %c0_13 = arith.constant 0 : index
    %c0_14 = arith.constant 0 : index
    %32 = vector.load %arg3[%c0_12, %c0_13, %c0_14] : memref<2x32x32xf32, #tpu.memory_space<vmem>>, vector<1x32x32xf32>
    %33 = vector.shape_cast %32 : vector<1x32x32xf32> to vector<32x32xf32>
    %cst_15 = arith.constant dense<0.000000e+00> : vector<8x32xf32>
    %34 = tpu.matmul %31, %33, %cst_15 {dimension_numbers = #tpu.dot_dimension_numbers<[1], [0], [0], [1], [0, 0, 1, 1], [], []>} : vector<8x32xf32>, vector<32x32xf32>, vector<8x32xf32> -> vector<8x32xf32>
    %cst_16 = arith.constant 0.000000e+00 : f32
    %35 = vector.broadcast %cst_16 : f32 to vector<8x32xf32>
    %36 = arith.maximumf %34, %35 : vector<8x32xf32>
    %c0_17 = arith.constant 0 : index
    %c0_18 = arith.constant 0 : index
    %c0_19 = arith.constant 0 : index
    %37 = vector.load %arg4[%c0_17, %c0_18, %c0_19] : memref<2x32x32xf32, #tpu.memory_space<vmem>>, vector<1x32x32xf32>
    %38 = vector.shape_cast %37 : vector<1x32x32xf32> to vector<32x32xf32>
    %cst_20 = arith.constant dense<0.000000e+00> : vector<8x32xf32>
    %39 = tpu.matmul %36, %38, %cst_20 {dimension_numbers = #tpu.dot_dimension_numbers<[1], [0], [0], [1], [0, 0, 1, 1], [], []>} : vector<8x32xf32>, vector<32x32xf32>, vector<8x32xf32> -> vector<8x32xf32>
    %40 = arith.addf %39, %31 : vector<8x32xf32>
    %cst_21 = arith.constant dense<0.000000e+00> : vector<8xf32>
    %41 = vector.multi_reduction <add>, %40, %cst_21 [1] : vector<8x32xf32> to vector<8xf32>
    %42 = vector.shape_cast %41 : vector<8xf32> to vector<8x1xf32>
    %cst_22 = arith.constant 3.125000e-02 : f32
    %43 = vector.broadcast %cst_22 : f32 to vector<8x1xf32>
    %44 = arith.mulf %42, %43 : vector<8x1xf32>
    %45 = vector.broadcast %44 : vector<8x1xf32> to vector<8x32xf32>
    %46 = arith.subf %40, %45 : vector<8x32xf32>
    %47 = arith.mulf %46, %46 : vector<8x32xf32>
    %cst_23 = arith.constant dense<0.000000e+00> : vector<8xf32>
    %48 = vector.multi_reduction <add>, %47, %cst_23 [1] : vector<8x32xf32> to vector<8xf32>
    %49 = vector.shape_cast %48 : vector<8xf32> to vector<8x1xf32>
    %cst_24 = arith.constant 0.0322580636 : f32
    %50 = vector.broadcast %cst_24 : f32 to vector<8x1xf32>
    %51 = arith.mulf %49, %50 : vector<8x1xf32>
    %52 = math.rsqrt %51 : vector<8x1xf32>
    %53 = vector.broadcast %52 : vector<8x1xf32> to vector<8x32xf32>
    %54 = arith.mulf %46, %53 : vector<8x32xf32>
    %c0_25 = arith.constant 0 : index
    %c0_26 = arith.constant 0 : index
    %c0_27 = arith.constant 0 : index
    %55 = vector.load %arg2[%c0_25, %c0_26, %c0_27] : memref<1x32x32xf32, #tpu.memory_space<vmem>>, vector<1x32x32xf32>
    %56 = vector.shape_cast %55 : vector<1x32x32xf32> to vector<32x32xf32>
    %cst_28 = arith.constant dense<0.000000e+00> : vector<8x32xf32>
    %57 = tpu.matmul %54, %56, %cst_28 {dimension_numbers = #tpu.dot_dimension_numbers<[1], [0], [0], [1], [0, 0, 1, 1], [], []>} : vector<8x32xf32>, vector<32x32xf32>, vector<8x32xf32> -> vector<8x32xf32>
    %cst_29 = arith.constant dense<0.000000e+00> : vector<8x8xf32>
    %58 = tpu.matmul %57, %57, %cst_29 {dimension_numbers = #tpu.dot_dimension_numbers<[1], [1], [0], [0], [0, 0, 1, 0], [], []>} : vector<8x32xf32>, vector<8x32xf32>, vector<8x8xf32> -> vector<8x8xf32>
    %cst_30 = arith.constant 3.125000e-02 : f32
    %59 = vector.broadcast %cst_30 : f32 to vector<8x8xf32>
    %60 = arith.mulf %58, %59 : vector<8x8xf32>
    %cst_31 = arith.constant dense<0xFF800000> : vector<8xf32>
    %61 = vector.multi_reduction <maximumf>, %60, %cst_31 [1] : vector<8x8xf32> to vector<8xf32>
    %62 = vector.shape_cast %61 : vector<8xf32> to vector<8x1xf32>
    %63 = vector.broadcast %62 : vector<8x1xf32> to vector<8x8xf32>
    %64 = arith.subf %60, %63 : vector<8x8xf32>
    %65 = math.exp %64 : vector<8x8xf32>
    %cst_32 = arith.constant dense<0.000000e+00> : vector<8xf32>
    %66 = vector.multi_reduction <add>, %65, %cst_32 [1] : vector<8x8xf32> to vector<8xf32>
    %67 = vector.shape_cast %66 : vector<8xf32> to vector<8x1xf32>
    %68 = tpu.reciprocal %67 {approx = true} : vector<8x1xf32> -> vector<8x1xf32>
    %69 = vector.broadcast %68 : vector<8x1xf32> to vector<8x8xf32>
    %70 = arith.mulf %65, %69 : vector<8x8xf32>
    %cst_33 = arith.constant dense<0.000000e+00> : vector<8x32xf32>
    %71 = tpu.matmul %70, %57, %cst_33 {dimension_numbers = #tpu.dot_dimension_numbers<[1], [0], [0], [1], [0, 0, 1, 1], [], []>} : vector<8x8xf32>, vector<8x32xf32>, vector<8x32xf32> -> vector<8x32xf32>
    %72 = arith.addf %57, %71 : vector<8x32xf32>
    %cst_34 = arith.constant dense<0.000000e+00> : vector<8xf32>
    %73 = vector.multi_reduction <add>, %72, %cst_34 [1] : vector<8x32xf32> to vector<8xf32>
    %74 = vector.shape_cast %73 : vector<8xf32> to vector<8x1xf32>
    %cst_35 = arith.constant 3.125000e-02 : f32
    %75 = vector.broadcast %cst_35 : f32 to vector<8x1xf32>
    %76 = arith.mulf %74, %75 : vector<8x1xf32>
    %77 = vector.broadcast %76 : vector<8x1xf32> to vector<8x32xf32>
    %78 = arith.subf %72, %77 : vector<8x32xf32>
    %79 = arith.mulf %78, %78 : vector<8x32xf32>
    %cst_36 = arith.constant dense<0.000000e+00> : vector<8xf32>
    %80 = vector.multi_reduction <add>, %79, %cst_36 [1] : vector<8x32xf32> to vector<8xf32>
    %81 = vector.shape_cast %80 : vector<8xf32> to vector<8x1xf32>
    %cst_37 = arith.constant 0.0322580636 : f32
    %82 = vector.broadcast %cst_37 : f32 to vector<8x1xf32>
    %83 = arith.mulf %81, %82 : vector<8x1xf32>
    %84 = math.rsqrt %83 : vector<8x1xf32>
    %85 = vector.broadcast %84 : vector<8x1xf32> to vector<8x32xf32>
    %86 = arith.mulf %78, %85 : vector<8x32xf32>
    %c1 = arith.constant 1 : index
    %c0_38 = arith.constant 0 : index
    %c0_39 = arith.constant 0 : index
    %87 = vector.load %arg3[%c1, %c0_38, %c0_39] : memref<2x32x32xf32, #tpu.memory_space<vmem>>, vector<1x32x32xf32>
    %88 = vector.shape_cast %87 : vector<1x32x32xf32> to vector<32x32xf32>
    %cst_40 = arith.constant dense<0.000000e+00> : vector<8x32xf32>
    %89 = tpu.matmul %86, %88, %cst_40 {dimension_numbers = #tpu.dot_dimension_numbers<[1], [0], [0], [1], [0, 0, 1, 1], [], []>} : vector<8x32xf32>, vector<32x32xf32>, vector<8x32xf32> -> vector<8x32xf32>
    %cst_41 = arith.constant 0.000000e+00 : f32
    %90 = vector.broadcast %cst_41 : f32 to vector<8x32xf32>
    %91 = arith.maximumf %89, %90 : vector<8x32xf32>
    %c1_42 = arith.constant 1 : index
    %c0_43 = arith.constant 0 : index
    %c0_44 = arith.constant 0 : index
    %92 = vector.load %arg4[%c1_42, %c0_43, %c0_44] : memref<2x32x32xf32, #tpu.memory_space<vmem>>, vector<1x32x32xf32>
    %93 = vector.shape_cast %92 : vector<1x32x32xf32> to vector<32x32xf32>
    %cst_45 = arith.constant dense<0.000000e+00> : vector<8x32xf32>
    %94 = tpu.matmul %91, %93, %cst_45 {dimension_numbers = #tpu.dot_dimension_numbers<[1], [0], [0], [1], [0, 0, 1, 1], [], []>} : vector<8x32xf32>, vector<32x32xf32>, vector<8x32xf32> -> vector<8x32xf32>
    %95 = arith.addf %94, %86 : vector<8x32xf32>
    %cst_46 = arith.constant dense<0.000000e+00> : vector<8xf32>
    %96 = vector.multi_reduction <add>, %95, %cst_46 [1] : vector<8x32xf32> to vector<8xf32>
    %97 = vector.shape_cast %96 : vector<8xf32> to vector<8x1xf32>
    %cst_47 = arith.constant 3.125000e-02 : f32
    %98 = vector.broadcast %cst_47 : f32 to vector<8x1xf32>
    %99 = arith.mulf %97, %98 : vector<8x1xf32>
    %100 = vector.broadcast %99 : vector<8x1xf32> to vector<8x32xf32>
    %101 = arith.subf %95, %100 : vector<8x32xf32>
    %102 = arith.mulf %101, %101 : vector<8x32xf32>
    %cst_48 = arith.constant dense<0.000000e+00> : vector<8xf32>
    %103 = vector.multi_reduction <add>, %102, %cst_48 [1] : vector<8x32xf32> to vector<8xf32>
    %104 = vector.shape_cast %103 : vector<8xf32> to vector<8x1xf32>
    %cst_49 = arith.constant 0.0322580636 : f32
    %105 = vector.broadcast %cst_49 : f32 to vector<8x1xf32>
    %106 = arith.mulf %104, %105 : vector<8x1xf32>
    %107 = math.rsqrt %106 : vector<8x1xf32>
    %108 = vector.broadcast %107 : vector<8x1xf32> to vector<8x32xf32>
    %109 = arith.mulf %101, %108 : vector<8x32xf32>
    %c0_50 = arith.constant 0 : index
    %c0_51 = arith.constant 0 : index
    %110 = vector.load %arg5[%c0_50, %c0_51] : memref<1x32xf32, #tpu.memory_space<vmem>>, vector<1x32xf32>
    %cst_52 = arith.constant dense<0.000000e+00> : vector<32xf32>
    %111 = vector.multi_reduction <add>, %109, %cst_52 [0] : vector<8x32xf32> to vector<32xf32>
    %112 = vector.shape_cast %111 : vector<32xf32> to vector<1x32xf32>
    %cst_53 = arith.constant 1.250000e-01 : f32
    %113 = vector.broadcast %cst_53 : f32 to vector<1x32xf32>
    %114 = arith.mulf %112, %113 : vector<1x32xf32>
    %115 = arith.mulf %114, %110 : vector<1x32xf32>
    %116 = vector.shape_cast %115 : vector<1x32xf32> to vector<1x1x32xf32>
    %cst_54 = arith.constant dense<0.000000e+00> : vector<1xf32>
    %117 = vector.multi_reduction <add>, %116, %cst_54 [1, 2] : vector<1x1x32xf32> to vector<1xf32>
    %118 = vector.shape_cast %117 : vector<1xf32> to vector<1x1x1xf32>
    %119 = vector.extract %118[0, 0, 0] : f32 from vector<1x1x1xf32>
    %c0_55 = arith.constant 0 : index
    %c0_56 = arith.constant 0 : index
    %120 = memref.load %arg6[%c0_55, %c0_56] : memref<1x1xf32, #tpu.memory_space<smem>>
    memref.store %119, %arg6[%c0_55, %c0_56] : memref<1x1xf32, #tpu.memory_space<smem>>
    return
  }
}

</mosaic_0001>

<llo_original>
// kernel: tpu_custom_call.1
$region0: #{tpu_custom_call.1}
  #allocation0 [shape = 'u32[]', space=smem, size = 0x4, offset = 0x4, fixed_abs, tag = 'smem constant byte address 0x4 - core index']
  #allocation1 [shape = 'u32[72,128]{1,0:T(1,128)}', space=vmem, size = 0x9000, scoped, tag = 'internal scratch']
  %s0 = inlined_call_operand.hbm [shape: f32[8,16], index: 0, kind: input, shape index: {}]
  %s1 = inlined_call_operand.hbm [shape: f32[16,32], index: 1, kind: input, shape index: {}]
  %s2 = inlined_call_operand.hbm [shape: f32[1,32,32], index: 2, kind: input, shape index: {}]
  %s3 = inlined_call_operand.hbm [shape: f32[2,32,32], index: 3, kind: input, shape index: {}]
  %s4 = inlined_call_operand.hbm [shape: f32[2,32,32], index: 4, kind: input, shape index: {}]
  %s5 = inlined_call_operand.vmem [shape: f32[1,32], index: 5, kind: input, shape index: {}]
  %s6 = inlined_call_operand.hbm [shape: f32[1,1], index: 6, kind: output, shape index: {}]
  %s7 = sld [smem:[#allocation0]]
  $region54: #{tpu_custom_call.1} parent=0
    _
  %s9 = ssub.s32 1, %s7
  %s10 = scalar_select 0, %s9, %s7
  $region1: #{tpu_custom_call.1} parent=0
    #allocation2 [shape = 'u8[4096]{0}', space=vmem, size = 0x1000, scoped, tag = 'input window, operand 0, single buffered']
    #allocation3 [shape = 's32[1]{0}', space=sflag, size = 0x4, scoped, tag = 'scoped memory for tpu_custom_call.1']
    #allocation4 [shape = 's32[1]{0}', space=sflag, size = 0x4, scoped, tag = 'scoped memory for tpu_custom_call.1']
    #allocation5 [shape = 'u8[8192]{0}', space=vmem, size = 0x2000, scoped, tag = 'input window, operand 1, single buffered']
    #allocation6 [shape = 's32[1]{0}', space=sflag, size = 0x4, scoped, tag = 'scoped memory for tpu_custom_call.1']
    #allocation7 [shape = 'u8[16384]{0}', space=vmem, size = 0x4000, scoped, tag = 'input window, operand 2, single buffered']
    #allocation8 [shape = 'u8[32768]{0}', space=vmem, size = 0x8000, scoped, tag = 'input window, operand 3, single buffered']
    #allocation9 [shape = 's32[1]{0}', space=sflag, size = 0x4, scoped, tag = 'scoped memory for tpu_custom_call.1']
    #allocation10 [shape = 'u8[32768]{0}', space=vmem, size = 0x8000, scoped, tag = 'input window, operand 4, single buffered']
    #allocation11 [shape = 'u8[512]{0}', space=smem, size = 0x200, scoped, tag = 'output window, operand 0, single buffered']
    %11 = vsyncpa [#allocation3], 0
    %12 = vsyncpa [#allocation6], 0
    %13 = vsyncpa [#allocation9], 0
    %14 = vsyncpa [#allocation4], 0
    // Predicated region
    $region2: #{tpu_custom_call.1} parent=1 // pred_check
      _
    $region3: #{tpu_custom_call.1} parent=1 // pred_check_branch
      %16 = sbr.rel (0) target = $region5
    $region4: #{tpu_custom_call.1} parent=1 // pred_region
      %18 = vsyncadd [#allocation3], 0
      %s20 = sshll.u32 %s0, 4
      %s21 = int_to_ptr.hbm [resolvable:$true] %s20
      %s22 = sshll.u32 [#allocation2], 4
      %s23 = int_to_ptr.vmem [resolvable:$true] %s22
      %25 = dma.hbm_to_vmem [thread:$0]  %s21, 128, %s23, [#allocation3]
    $region5: #{tpu_custom_call.1} parent=1 // pred_fallthru
      _
    // Predicated region
    $region6: #{tpu_custom_call.1} parent=1 // pred_check
      _
    $region7: #{tpu_custom_call.1} parent=1 // pred_check_branch
      %27 = sbr.rel (0) target = $region9
    $region8: #{tpu_custom_call.1} parent=1 // pred_region
      %29 = vsyncadd [#allocation6], 0
      %s30 = sshll.u32 %s1, 4
      %s31 = int_to_ptr.hbm [resolvable:$true] %s30
      %s32 = sshll.u32 [#allocation5], 4
      %s33 = int_to_ptr.vmem [resolvable:$true] %s32
      %38 = dma.hbm_to_vmem [thread:$0]  %s31, 256, %s33, [#allocation6], 128, 128, 8
    $region9: #{tpu_custom_call.1} parent=1 // pred_fallthru
      _
    // Predicated region
    $region10: #{tpu_custom_call.1} parent=1 // pred_check
      _
    $region11: #{tpu_custom_call.1} parent=1 // pred_check_branch
      %40 = sbr.rel (0) target = $region13
    $region12: #{tpu_custom_call.1} parent=1 // pred_region
      %42 = vsyncadd [#allocation6], 0
      %s43 = sshll.u32 %s2, 4
      %s44 = int_to_ptr.hbm [resolvable:$true] %s43
      %s45 = sshll.u32 [#allocation7], 4
      %s46 = int_to_ptr.vmem [resolvable:$true] %s45
      %51 = dma.hbm_to_vmem [thread:$0]  %s44, 512, %s46, [#allocation6], 128, 128, 8
    $region13: #{tpu_custom_call.1} parent=1 // pred_fallthru
      _
    // Predicated region
    $region14: #{tpu_custom_call.1} parent=1 // pred_check
      _
    $region15: #{tpu_custom_call.1} parent=1 // pred_check_branch
      %53 = sbr.rel (0) target = $region17
    $region16: #{tpu_custom_call.1} parent=1 // pred_region
      %55 = vsyncadd [#allocation9], 0
      %s56 = sshll.u32 %s3, 4
      %s57 = int_to_ptr.hbm [resolvable:$true] %s56
      %s58 = sshll.u32 [#allocation8], 4
      %s59 = int_to_ptr.vmem [resolvable:$true] %s58
      %64 = dma.hbm_to_vmem [thread:$0]  %s57, 1024, %s59, [#allocation9], 128, 128, 8
    $region17: #{tpu_custom_call.1} parent=1 // pred_fallthru
      _
    // Predicated region
    $region18: #{tpu_custom_call.1} parent=1 // pred_check
      _
    $region19: #{tpu_custom_call.1} parent=1 // pred_check_branch
      %66 = sbr.rel (0) target = $region21
    $region20: #{tpu_custom_call.1} parent=1 // pred_region
      %68 = vsyncadd [#allocation9], 0
      %s69 = sshll.u32 %s4, 4
      %s70 = int_to_ptr.hbm [resolvable:$true] %s69
      %s71 = sshll.u32 [#allocation10], 4
      %s72 = int_to_ptr.vmem [resolvable:$true] %s71
      %77 = dma.hbm_to_vmem [thread:$0]  %s70, 1024, %s72, [#allocation9], 128, 128, 8
    $region21: #{tpu_custom_call.1} parent=1 // pred_fallthru
      _
    // Predicated region
    $region22: #{tpu_custom_call.1} parent=1 // pred_check
      _
    $region23: #{tpu_custom_call.1} parent=1 // pred_check_branch
      %79 = sbr.rel (0) target = $region25
    $region24: #{tpu_custom_call.1} parent=1 // pred_region
      _
    $region25: #{tpu_custom_call.1} parent=1 // pred_fallthru
      _
    // Predicated region
    $region26: #{tpu_custom_call.1} parent=1 // pred_check
      _
    $region27: #{tpu_custom_call.1} parent=1 // pred_check_branch
      %81 = sbr.rel (0) target = $region29
    $region28: #{tpu_custom_call.1} parent=1 // pred_region
      %83 = dma.done [#allocation3], 128
    $region29: #{tpu_custom_call.1} parent=1 // pred_fallthru
      _
    // Predicated region
    $region30: #{tpu_custom_call.1} parent=1 // pred_check
      _
    $region31: #{tpu_custom_call.1} parent=1 // pred_check_branch
      %85 = sbr.rel (0) target = $region33
    $region32: #{tpu_custom_call.1} parent=1 // pred_region
      %87 = dma.done [#allocation6], 256
    $region33: #{tpu_custom_call.1} parent=1 // pred_fallthru
      _
    // Predicated region
    $region34: #{tpu_custom_call.1} parent=1 // pred_check
      _
    $region35: #{tpu_custom_call.1} parent=1 // pred_check_branch
      %89 = sbr.rel (0) target = $region37
    $region36: #{tpu_custom_call.1} parent=1 // pred_region
      %91 = dma.done [#allocation6], 512
    $region37: #{tpu_custom_call.1} parent=1 // pred_fallthru
      _
    // Predicated region
    $region38: #{tpu_custom_call.1} parent=1 // pred_check
      _
    $region39: #{tpu_custom_call.1} parent=1 // pred_check_branch
      %93 = sbr.rel (0) target = $region41
    $region40: #{tpu_custom_call.1} parent=1 // pred_region
      %95 = dma.done [#allocation9], 1024
    $region41: #{tpu_custom_call.1} parent=1 // pred_fallthru
      _
    // Predicated region
    $region42: #{tpu_custom_call.1} parent=1 // pred_check
      _
    $region43: #{tpu_custom_call.1} parent=1 // pred_check_branch
      %97 = sbr.rel (0) target = $region45
    $region44: #{tpu_custom_call.1} parent=1 // pred_region
      %99 = dma.done [#allocation9], 1024
    $region45: #{tpu_custom_call.1} parent=1 // pred_fallthru
      _
    %v100 = vld [vmem:[#allocation2] sm:$0xff]
    %v101 = vld [vmem:[#allocation5] sm:$0xff]
    %v102 = vld [vmem:[#allocation5 + $0x8] sm:$0xff]
    %vm103 = vcmask 130048
    %v105 = vsel %vm103, %v100, 0
    %107 = vmatpush.msra.mxu0 0.0
    %108 = vmatpush.msra.mxu0 0.0
    %109 = vmatpush.msra.mxu0 0.0
    %110 = vmatpush.msra.mxu0 0.0
    %111 = vmatpush.msra.mxu0 0.0
    %112 = vmatpush.msra.mxu0 0.0
    %113 = vmatpush.msra.mxu0 0.0
    %114 = vmatpush.msra.mxu0 0.0
    %115 = vmatpush.msra.mxu0 0.0
    %116 = vmatpush.msra.mxu0 0.0
    %117 = vmatpush.msra.mxu0 0.0
    %118 = vmatpush.msra.mxu0 0.0
    %119 = vmatpush.msra.mxu0 0.0
    %120 = vmatpush.msra.mxu0 0.0
    %121 = vmatpush.msra.mxu0 %v102
    %122 = vmatpush.msra.mxu0 %v101
    %123 = vmatmul.f32.gmra.mxu0 %v105
    %v124 = vpop.f32.mrf.mxu0
    %v125 = vadd.f32 0.0, %v124
    %126 = vdwg.mxu0
    %vm127 = vcmask 261120
    %v129 = vsel %vm127, %v125, 0
    %131 = vmatpush.xpose.msra.mxu0 0.0
    %132 = vmatpush.xpose.msra.mxu0 0.0
    %133 = vmatpush.xpose.msra.mxu0 0.0
    %134 = vmatpush.xpose.msra.mxu0 0.0
    %135 = vmatpush.xpose.msra.mxu0 0.0
    %136 = vmatpush.xpose.msra.mxu0 0.0
    %137 = vmatpush.xpose.msra.mxu0 0.0
    %138 = vmatpush.xpose.msra.mxu0 0.0
    %139 = vmatpush.xpose.msra.mxu0 0.0
    %140 = vmatpush.xpose.msra.mxu0 0.0
    %141 = vmatpush.xpose.msra.mxu0 0.0
    %142 = vmatpush.xpose.msra.mxu0 0.0
    %143 = vmatpush.xpose.msra.mxu0 0.0
    %144 = vmatpush.xpose.msra.mxu0 0.0
    %145 = vmatpush.xpose.msra.mxu0 0.0
    %146 = vmatpush.xpose.msra.mxu0 %v129
    %147 = vmatmul.f32.gmra.mxu0 %v129
    %v148 = vpop.f32.mrf.mxu0
    %v149 = vadd.f32 0.0, %v148
    %150 = vdwg.mxu0
    %v151 = vmul.f32 %v149, 0.03125
    %vm152 = vcmask 64512
    %v153 = vsel %vm152, %v151, -inf
    %154 = vmax.xlane.f32.xlu0 %v153
    %v155 = vpop.xlane.xlu0 %154
    %v156 = vsub.f32 %v151, %v155
    %v157 = vmul.f32 %v156, 1.442695
    %v158 = vpow.pop %v157
    %v159 = vsel %vm152, %v158, 0.0
    %160 = vadd.xlane.f32.xlu0 %v159
    %v161 = vpop.xlane.xlu0 %160
    %v162 = vrcp.pop %v161
    %v163 = vmul.f32 %v158, %v162
    %v165 = vsel %vm152, %v163, 0
    %167 = vmatpush.msra.mxu0 0.0
    %168 = vmatpush.msra.mxu0 0.0
    %169 = vmatpush.msra.mxu0 0.0
    %170 = vmatpush.msra.mxu0 0.0
    %171 = vmatpush.msra.mxu0 0.0
    %172 = vmatpush.msra.mxu0 0.0
    %173 = vmatpush.msra.mxu0 0.0
    %174 = vmatpush.msra.mxu0 0.0
    %175 = vmatpush.msra.mxu0 0.0
    %176 = vmatpush.msra.mxu0 0.0
    %177 = vmatpush.msra.mxu0 0.0
    %178 = vmatpush.msra.mxu0 0.0
    %179 = vmatpush.msra.mxu0 0.0
    %180 = vmatpush.msra.mxu0 0.0
    %181 = vmatpush.msra.mxu0 0.0
    %182 = vmatpush.msra.mxu0 %v125
    %183 = vmatmul.f32.gmra.mxu0 %v165
    %v184 = vpop.f32.mrf.mxu0
    %v185 = vadd.f32 0.0, %v184
    %186 = vdwg.mxu0
    %v187 = vadd.f32 %v125, %v185
    %v188 = vsel %vm127, %v187, 0.0
    %189 = vadd.xlane.f32.xlu0 %v188
    %v190 = vpop.xlane.xlu0 %189
    %v191 = vmul.f32 %v190, 0.03125
    %v192 = vsub.f32 %v187, %v191
    %v193 = vmul.f32 %v192, %v192
    %v194 = vsel %vm127, %v193, 0.0
    %195 = vadd.xlane.f32.xlu0 %v194
    %v196 = vpop.xlane.xlu0 %195
    %v197 = vmul.f32 %v196, 0.032258064
    %v198 = vrsqrt.pop %v197
    %v199 = vmul.f32 %v198, %v197
    %v200 = vmul.f32 %v199, %v198
    %v201 = vmul.f32 0.5, %v200
    %v202 = vsub.f32 1.5, %v201
    %v203 = vmul.f32 %v198, %v202
    %vm204 = vweird.f32 %v197
    %vm205 = vweird.f32 %v198
    %vm206 = vmor %vm204, %vm205
    %v207 = vsel %vm206, %v198, %v203
    %v208 = vmul.f32 %v192, %v207
    %v209 = vld [vmem:[#allocation8] sm:$0xff]
    %v210 = vld [vmem:[#allocation8 + $0x8] sm:$0xff]
    %v211 = vld [vmem:[#allocation8 + $0x10] sm:$0xff]
    %v212 = vld [vmem:[#allocation8 + $0x18] sm:$0xff]
    %v214 = vsel %vm127, %v208, 0
    %216 = vmatpush.msra.mxu0 0.0
    %217 = vmatpush.msra.mxu0 0.0
    %218 = vmatpush.msra.mxu0 0.0
    %219 = vmatpush.msra.mxu0 0.0
    %220 = vmatpush.msra.mxu0 0.0
    %221 = vmatpush.msra.mxu0 0.0
    %222 = vmatpush.msra.mxu0 0.0
    %223 = vmatpush.msra.mxu0 0.0
    %224 = vmatpush.msra.mxu0 0.0
    %225 = vmatpush.msra.mxu0 0.0
    %226 = vmatpush.msra.mxu0 0.0
    %227 = vmatpush.msra.mxu0 0.0
    %228 = vmatpush.msra.mxu0 %v212
    %229 = vmatpush.msra.mxu0 %v211
    %230 = vmatpush.msra.mxu0 %v210
    %231 = vmatpush.msra.mxu0 %v209
    %232 = vmatmul.f32.gmra.mxu0 %v214
    %v233 = vpop.f32.mrf.mxu0
    %v234 = vadd.f32 0.0, %v233
    %235 = vdwg.mxu0
    %v236 = vmax.f32 %v234, 0.0
    %v237 = vld [vmem:[#allocation10] sm:$0xff]
    %v238 = vld [vmem:[#allocation10 + $0x8] sm:$0xff]
    %v239 = vld [vmem:[#allocation10 + $0x10] sm:$0xff]
    %v240 = vld [vmem:[#allocation10 + $0x18] sm:$0xff]
    %v242 = vsel %vm127, %v236, 0
    %244 = vmatpush.msra.mxu0 0.0
    %245 = vmatpush.msra.mxu0 0.0
    %246 = vmatpush.msra.mxu0 0.0
    %247 = vmatpush.msra.mxu0 0.0
    %248 = vmatpush.msra.mxu0 0.0
    %249 = vmatpush.msra.mxu0 0.0
    %250 = vmatpush.msra.mxu0 0.0
    %251 = vmatpush.msra.mxu0 0.0
    %252 = vmatpush.msra.mxu0 0.0
    %253 = vmatpush.msra.mxu0 0.0
    %254 = vmatpush.msra.mxu0 0.0
    %255 = vmatpush.msra.mxu0 0.0
    %256 = vmatpush.msra.mxu0 %v240
    %257 = vmatpush.msra.mxu0 %v239
    %258 = vmatpush.msra.mxu0 %v238
    %259 = vmatpush.msra.mxu0 %v237
    %260 = vmatmul.f32.gmra.mxu0 %v242
    %v261 = vpop.f32.mrf.mxu0
    %v262 = vadd.f32 %v208, %v261
    %263 = vdwg.mxu0
    %v264 = vsel %vm127, %v262, 0.0
    %265 = vadd.xlane.f32.xlu0 %v264
    %v266 = vpop.xlane.xlu0 %265
    %v267 = vmul.f32 %v266, 0.03125
    %v268 = vsub.f32 %v262, %v267
    %v269 = vmul.f32 %v268, %v268
    %v270 = vsel %vm127, %v269, 0.0
    %271 = vadd.xlane.f32.xlu0 %v270
    %v272 = vpop.xlane.xlu0 %271
    %v273 = vmul.f32 %v272, 0.032258064
    %v274 = vrsqrt.pop %v273
    %v275 = vmul.f32 %v274, %v273
    %v276 = vmul.f32 %v275, %v274
    %v277 = vmul.f32 0.5, %v276
    %v278 = vsub.f32 1.5, %v277
    %v279 = vmul.f32 %v274, %v278
    %vm280 = vweird.f32 %v273
    %vm281 = vweird.f32 %v274
    %vm282 = vmor %vm280, %vm281
    %v283 = vsel %vm282, %v274, %v279
    %v284 = vmul.f32 %v268, %v283
    %v285 = vld [vmem:[#allocation7] sm:$0xff]
    %v286 = vld [vmem:[#allocation7 + $0x8] sm:$0xff]
    %v287 = vld [vmem:[#allocation7 + $0x10] sm:$0xff]
    %v288 = vld [vmem:[#allocation7 + $0x18] sm:$0xff]
    %v290 = vsel %vm127, %v284, 0
    %292 = vmatpush.msra.mxu0 0.0
    %293 = vmatpush.msra.mxu0 0.0
    %294 = vmatpush.msra.mxu0 0.0
    %295 = vmatpush.msra.mxu0 0.0
    %296 = vmatpush.msra.mxu0 0.0
    %297 = vmatpush.msra.mxu0 0.0
    %298 = vmatpush.msra.mxu0 0.0
    %299 = vmatpush.msra.mxu0 0.0
    %300 = vmatpush.msra.mxu0 0.0
    %301 = vmatpush.msra.mxu0 0.0
    %302 = vmatpush.msra.mxu0 0.0
    %303 = vmatpush.msra.mxu0 0.0
    %304 = vmatpush.msra.mxu0 %v288
    %305 = vmatpush.msra.mxu0 %v287
    %306 = vmatpush.msra.mxu0 %v286
    %307 = vmatpush.msra.mxu0 %v285
    %308 = vmatmul.f32.gmra.mxu0 %v290
    %v309 = vpop.f32.mrf.mxu0
    %v310 = vadd.f32 0.0, %v309
    %311 = vdwg.mxu0
    %v313 = vsel %vm127, %v310, 0
    %315 = vmatpush.xpose.msra.mxu0 0.0
    %316 = vmatpush.xpose.msra.mxu0 0.0
    %317 = vmatpush.xpose.msra.mxu0 0.0
    %318 = vmatpush.xpose.msra.mxu0 0.0
    %319 = vmatpush.xpose.msra.mxu0 0.0
    %320 = vmatpush.xpose.msra.mxu0 0.0
    %321 = vmatpush.xpose.msra.mxu0 0.0
    %322 = vmatpush.xpose.msra.mxu0 0.0
    %323 = vmatpush.xpose.msra.mxu0 0.0
    %324 = vmatpush.xpose.msra.mxu0 0.0
    %325 = vmatpush.xpose.msra.mxu0 0.0
    %326 = vmatpush.xpose.msra.mxu0 0.0
    %327 = vmatpush.xpose.msra.mxu0 0.0
    %328 = vmatpush.xpose.msra.mxu0 0.0
    %329 = vmatpush.xpose.msra.mxu0 0.0
    %330 = vmatpush.xpose.msra.mxu0 %v313
    %331 = vmatmul.f32.gmra.mxu0 %v313
    %v332 = vpop.f32.mrf.mxu0
    %v333 = vadd.f32 0.0, %v332
    %334 = vdwg.mxu0
    %v335 = vmul.f32 %v333, 0.03125
    %v336 = vsel %vm152, %v335, -inf
    %337 = vmax.xlane.f32.xlu0 %v336
    %v338 = vpop.xlane.xlu0 %337
    %v339 = vsub.f32 %v335, %v338
    %v340 = vmul.f32 %v339, 1.442695
    %v341 = vpow.pop %v340
    %v342 = vsel %vm152, %v341, 0.0
    %343 = vadd.xlane.f32.xlu0 %v342
    %v344 = vpop.xlane.xlu0 %343
    %v345 = vrcp.pop %v344
    %v346 = vmul.f32 %v341, %v345
    %v348 = vsel %vm152, %v346, 0
    %350 = vmatpush.msra.mxu0 0.0
    %351 = vmatpush.msra.mxu0 0.0
    %352 = vmatpush.msra.mxu0 0.0
    %353 = vmatpush.msra.mxu0 0.0
    %354 = vmatpush.msra.mxu0 0.0
    %355 = vmatpush.msra.mxu0 0.0
    %356 = vmatpush.msra.mxu0 0.0
    %357 = vmatpush.msra.mxu0 0.0
    %358 = vmatpush.msra.mxu0 0.0
    %359 = vmatpush.msra.mxu0 0.0
    %360 = vmatpush.msra.mxu0 0.0
    %361 = vmatpush.msra.mxu0 0.0
    %362 = vmatpush.msra.mxu0 0.0
    %363 = vmatpush.msra.mxu0 0.0
    %364 = vmatpush.msra.mxu0 0.0
    %365 = vmatpush.msra.mxu0 %v310
    %366 = vmatmul.f32.gmra.mxu0 %v348
    %v367 = vpop.f32.mrf.mxu0
    %v368 = vadd.f32 0.0, %v367
    %369 = vdwg.mxu0
    %v370 = vadd.f32 %v310, %v368
    %v371 = vsel %vm127, %v370, 0.0
    %372 = vadd.xlane.f32.xlu0 %v371
    %v373 = vpop.xlane.xlu0 %372
    %v374 = vmul.f32 %v373, 0.03125
    %v375 = vsub.f32 %v370, %v374
    %v376 = vmul.f32 %v375, %v375
    %v377 = vsel %vm127, %v376, 0.0
    %378 = vadd.xlane.f32.xlu0 %v377
    %v379 = vpop.xlane.xlu0 %378
    %v380 = vmul.f32 %v379, 0.032258064
    %v381 = vrsqrt.pop %v380
    %v382 = vmul.f32 %v381, %v380
    %v383 = vmul.f32 %v382, %v381
    %v384 = vmul.f32 0.5, %v383
    %v385 = vsub.f32 1.5, %v384
    %v386 = vmul.f32 %v381, %v385
    %vm387 = vweird.f32 %v380
    %vm388 = vweird.f32 %v381
    %vm389 = vmor %vm387, %vm388
    %v390 = vsel %vm389, %v381, %v386
    %v391 = vmul.f32 %v375, %v390
    %s392 = scalar_lea.vmem [#allocation8], 32
    %v393 = vld [vmem:[%s392] sm:$0xff]
    %v394 = vld [vmem:[%s392 + $0x8] sm:$0xff]
    %v395 = vld [vmem:[%s392 + $0x10] sm:$0xff]
    %v396 = vld [vmem:[%s392 + $0x18] sm:$0xff]
    %v398 = vsel %vm127, %v391, 0
    %400 = vmatpush.msra.mxu0 0.0
    %401 = vmatpush.msra.mxu0 0.0
    %402 = vmatpush.msra.mxu0 0.0
    %403 = vmatpush.msra.mxu0 0.0
    %404 = vmatpush.msra.mxu0 0.0
    %405 = vmatpush.msra.mxu0 0.0
    %406 = vmatpush.msra.mxu0 0.0
    %407 = vmatpush.msra.mxu0 0.0
    %408 = vmatpush.msra.mxu0 0.0
    %409 = vmatpush.msra.mxu0 0.0
    %410 = vmatpush.msra.mxu0 0.0
    %411 = vmatpush.msra.mxu0 0.0
    %412 = vmatpush.msra.mxu0 %v396
    %413 = vmatpush.msra.mxu0 %v395
    %414 = vmatpush.msra.mxu0 %v394
    %415 = vmatpush.msra.mxu0 %v393
    %416 = vmatmul.f32.gmra.mxu0 %v398
    %v417 = vpop.f32.mrf.mxu0
    %v418 = vadd.f32 0.0, %v417
    %419 = vdwg.mxu0
    %v420 = vmax.f32 %v418, 0.0
    %s421 = scalar_lea.vmem [#allocation10], 32
    %v422 = vld [vmem:[%s421] sm:$0xff]
    %v423 = vld [vmem:[%s421 + $0x8] sm:$0xff]
    %v424 = vld [vmem:[%s421 + $0x10] sm:$0xff]
    %v425 = vld [vmem:[%s421 + $0x18] sm:$0xff]
    %v427 = vsel %vm127, %v420, 0
    %429 = vmatpush.msra.mxu0 0.0
    %430 = vmatpush.msra.mxu0 0.0
    %431 = vmatpush.msra.mxu0 0.0
    %432 = vmatpush.msra.mxu0 0.0
    %433 = vmatpush.msra.mxu0 0.0
    %434 = vmatpush.msra.mxu0 0.0
    %435 = vmatpush.msra.mxu0 0.0
    %436 = vmatpush.msra.mxu0 0.0
    %437 = vmatpush.msra.mxu0 0.0
    %438 = vmatpush.msra.mxu0 0.0
    %439 = vmatpush.msra.mxu0 0.0
    %440 = vmatpush.msra.mxu0 0.0
    %441 = vmatpush.msra.mxu0 %v425
    %442 = vmatpush.msra.mxu0 %v424
    %443 = vmatpush.msra.mxu0 %v423
    %444 = vmatpush.msra.mxu0 %v422
    %445 = vmatmul.f32.gmra.mxu0 %v427
    %v446 = vpop.f32.mrf.mxu0
    %v447 = vadd.f32 %v391, %v446
    %448 = vdwg.mxu0
    %v449 = vsel %vm127, %v447, 0.0
    %450 = vadd.xlane.f32.xlu0 %v449
    %v451 = vpop.xlane.xlu0 %450
    %v452 = vmul.f32 %v451, 0.03125
    %v453 = vsub.f32 %v447, %v452
    %v454 = vmul.f32 %v453, %v453
    %v455 = vsel %vm127, %v454, 0.0
    %456 = vadd.xlane.f32.xlu0 %v455
    %v457 = vpop.xlane.xlu0 %456
    %v458 = vmul.f32 %v457, 0.032258064
    %v459 = vrsqrt.pop %v458
    %v460 = vmul.f32 %v459, %v458
    %v461 = vmul.f32 %v460, %v459
    %v462 = vmul.f32 0.5, %v461
    %v463 = vsub.f32 1.5, %v462
    %v464 = vmul.f32 %v459, %v463
    %vm465 = vweird.f32 %v458
    %vm466 = vweird.f32 %v459
    %vm467 = vmor %vm465, %vm466
    %v468 = vsel %vm467, %v459, %v464
    %v469 = vmul.f32 %v453, %v468
    %v470 = vld [vmem:[%s5] sm:$0x1]
    %v471 = vsel %vm127, %v469, 0.0
    %v472 = vrot.slane %v471, 4
    %v473 = vadd.f32 %v471, %v472
    %v474 = vrot.slane %v473, 2
    %v475 = vadd.f32 %v473, %v474
    %v476 = vrot.slane %v475, 1
    %v477 = vadd.f32 %v475, %v476
    %v478 = vmul.f32 %v477, 0.125
    %v479 = vmul.f32 %v478, %v470
    %vm480 = vcmask 253952
    %v481 = vsel %vm480, %v479, 0.0
    %482 = vadd.xlane.f32.xlu0 %v481
    %v483 = vpop.xlane.xlu0 %482
    %v484 = vrot.slane %v483, 4
    %v485 = vadd.f32 %v483, %v484
    %v486 = vrot.slane %v485, 2
    %v487 = vadd.f32 %v485, %v486
    %v488 = vrot.slane %v487, 1
    %v489 = vadd.f32 %v487, %v488
    %s490 = vtos %v489
    %s491 = scalar_lea.smem [#allocation11], 0
    %492 = sst [smem:[%s491]] %s490
    // Predicated region
    $region46: #{tpu_custom_call.1} parent=1 // pred_check
      _
    $region47: #{tpu_custom_call.1} parent=1 // pred_check_branch
      %494 = sbr.rel (0) target = $region49
    $region48: #{tpu_custom_call.1} parent=1 // pred_region
      %496 = vsyncadd [#allocation4], 0
      %s498 = sshll.u32 %s6, 4
      %s499 = int_to_ptr.hbm [resolvable:$true] %s498
      %501 = dma.smem_to_hbm [#allocation11], 16, %s499, [#allocation4]
    $region49: #{tpu_custom_call.1} parent=1 // pred_fallthru
      _
    // Predicated region
    $region50: #{tpu_custom_call.1} parent=1 // pred_check
      _
    $region51: #{tpu_custom_call.1} parent=1 // pred_check_branch
      %503 = sbr.rel (0) target = $region53
    $region52: #{tpu_custom_call.1} parent=1 // pred_region
      %505 = dma.done [#allocation4], 16
    $region53: #{tpu_custom_call.1} parent=1 // pred_fallthru
      _
    %506 = sfence
    %507 = vsyncpa [#allocation3], 1
    %508 = vsyncpa [#allocation6], 1
    %509 = vsyncpa [#allocation9], 1
    %510 = vsyncpa [#allocation4], 1

</llo_original>
